<compile_context>
chip_gen: v5e
topology: v5e:2x2
jax: 0.10.0
libtpu: 0.0.40
codegen_flags: <defaults>
</compile_context>

<pallas_src>
import numpy as np
import jax
import jax.numpy as jnp
from jax.experimental import pallas as pl
from jax.experimental.pallas import tpu as pltpu


# ---------------------------------------------------------------------------
# Bicubic weights (PyTorch interpolate(mode='bicubic', align_corners=False))
# ---------------------------------------------------------------------------
def bicubic_weight_matrix(in_size: int, out_size: int, A: float = -0.75) -> np.ndarray:
    """Dense (out_size, in_size) matrix reproducing PyTorch bicubic (align_corners=False)."""
    scale = in_size / out_size
    out_idx = np.arange(out_size)
    real = scale * (out_idx + 0.5) - 0.5
    i0 = np.floor(real).astype(np.int64)
    t = real - i0

    def cc1(x):  # |x| <= 1
        return ((A + 2.0) * x - (A + 3.0)) * x * x + 1.0

    def cc2(x):  # 1 < |x| < 2
        return ((A * x - 5.0 * A) * x + 8.0 * A) * x - 4.0 * A

    coeffs = np.stack([cc2(t + 1.0), cc1(t), cc1(1.0 - t), cc2(2.0 - t)], axis=1)
    W = np.zeros((out_size, in_size), dtype=np.float32)
    for k in range(4):
        idx = np.clip(i0 + k - 1, 0, in_size - 1)
        np.add.at(W, (out_idx, idx), coeffs[:, k].astype(np.float32))
    return W


# ---------------------------------------------------------------------------
# Hardware-aware sizing helpers
# ---------------------------------------------------------------------------
def _round_up(x: int, m: int) -> int:
    return ((x + m - 1) // m) * m


def _padded_bytes(rows: int, cols: int, itemsize: int = 4) -> int:
    """VMEM footprint of a (rows, cols) f32 tile after (8,128) layout padding."""
    return _round_up(rows, 8) * _round_up(cols, 128) * itemsize


def _tpu_vmem_info():
    """(usable_vmem_limit_bytes, two_tensorcores_heuristic)."""
    phys = 64 * 1024 * 1024  # conservative default (v7x-class)
    try:
        info = pltpu.get_tpu_info()
        phys = int(getattr(info, "vmem_capacity_bytes", phys))
    except Exception:
        pass
    # v7x: 64 MiB VMEM per TensorCore, 2 TCs/chip.  v5e/v6e: 128 MiB, 1 TC.
    two_cores = phys <= 64 * 1024 * 1024
    vmem_limit = min(phys - 16 * 1024 * 1024, 96 * 1024 * 1024)
    vmem_limit = max(vmem_limit, 32 * 1024 * 1024)
    return vmem_limit, two_cores


def _choose_block_channels(nc, per_row_bytes, resident_bytes, vmem_limit, two_cores):
    """Pick bc (multiple of 8) so the pipelined tiles + resident weights fit VMEM."""
    nc8 = _round_up(nc, 8)
    headroom = 4 * 1024 * 1024  # Mosaic internal scratch / semaphores
    budget = max(vmem_limit - resident_bytes - headroom, per_row_bytes * 8)
    bc = max(8, (budget // per_row_bytes) // 8 * 8)
    if bc >= 512:
        bc = (bc // 256) * 256  # MXU-friendly M tile once compute-bound
    bc = min(bc, nc8)
    # Only split for megacore sharding when there really are 2 TensorCores (v7x).
    if two_cores and nc8 >= 16 and pl.cdiv(nc8, bc) < 2:
        bc = max(8, _round_up(nc8 // 2, 8))
    return int(bc)


# ---------------------------------------------------------------------------
# Kernels
# ---------------------------------------------------------------------------
def _kron_interp_add_kernel(wt_ref, x1_ref, x2_ref, o_ref):
    # wt_ref: (Hin*Win, Hout*Wout) resident kron(Wy, Wx)^T
    # x1_ref: (bc, Hin*Win), x2_ref/o_ref: (bc, Hout*Wout)   (lane-dense stores)
    up = jnp.dot(x1_ref[...].astype(jnp.float32), wt_ref[...],
                 preferred_element_type=jnp.float32)
    o_ref[...] = (up + x2_ref[...].astype(jnp.float32)).astype(o_ref.dtype)


def _separable_interp_add_kernel(wy_ref, wxt_ref, x1_ref, x2_ref, o_ref):
    # wy_ref: (Hout, Hin), wxt_ref: (Win, Wout)
    # x1_ref: (bc, Hin, Win), x2_ref/o_ref: (bc, Hout, Wout)
    wy = wy_ref[...]
    wxt = wxt_ref[...]

    def body(i, carry):
        t = jnp.dot(x1_ref[i].astype(jnp.float32), wxt,
                    preferred_element_type=jnp.float32)          # (Hin, Wout)
        up = jnp.dot(wy, t, preferred_element_type=jnp.float32)  # (Hout, Wout)
        o_ref[i] = (up + x2_ref[i].astype(jnp.float32)).astype(o_ref.dtype)
        return carry

    jax.lax.fori_loop(0, x1_ref.shape[0], body, 0)


# ---------------------------------------------------------------------------
# Wrapper
# ---------------------------------------------------------------------------
_KRON_MAX_BYTES = 2 * 1024 * 1024  # above this, the separable path wins (FLOPs + VMEM)


def bicubic_upsample_add(x1, x2, *, donate_x2: bool = False, force_path: str = "auto"):
    """x1: (N, C, Hin, Win), x2: (N, C, Hout, Wout) -> bicubic_resize(x1) + x2."""
    N, C, Hin, Win = x1.shape
    N2, C2, Hout, Wout = x2.shape
    assert (N, C) == (N2, C2), "x1/x2 must share batch and channel dims"

    nc = N * C
    in_elems, out_elems = Hin * Win, Hout * Wout
    vmem_limit, two_cores = _tpu_vmem_info()

    wy = bicubic_weight_matrix(Hin, Hout)  # (Hout, Hin)
    wx = bicubic_weight_matrix(Win, Wout)  # (Wout, Win)

    kron_bytes = _padded_bytes(in_elems, out_elems)
    use_kron = kron_bytes <= _KRON_MAX_BYTES
    if force_path == "kron":
        use_kron = True
    elif force_path == "separable":
        use_kron = False

    compiler_params = pltpu.CompilerParams(
        dimension_semantics=("parallel",),
        vmem_limit_bytes=int(vmem_limit),
    )

    if use_kron:
        # Single fused matmul: out = x1_flat @ kron(Wy, Wx)^T + x2_flat
        wt = jnp.asarray(np.kron(wy, wx).T)  # (Hin*Win, Hout*Wout), pre-transposed
        x1_flat = x1.reshape(nc, in_elems)
        x2_flat = x2.reshape(nc, out_elems)

        per_row = (_round_up(in_elems, 128) + 2 * _round_up(out_elems, 128)) * 4 * 2
        resident = 2 * kron_bytes  # constant-index weight: fetched once, 2 buffers
        bc = _choose_block_channels(nc, per_row, resident, vmem_limit, two_cores)
        grid = (pl.cdiv(nc, bc),)  # ragged last block handled by Pallas masking

        kwargs = {"input_output_aliases": {2: 0}} if donate_x2 else {}
        out_flat = pl.pallas_call(
            _kron_interp_add_kernel,
            out_shape=jax.ShapeDtypeStruct((nc, out_elems), x2.dtype),
            grid_spec=pltpu.PrefetchScalarGridSpec(
                num_scalar_prefetch=0,
                grid=grid,
                in_specs=[
                    pl.BlockSpec((in_elems, out_elems), lambda i: (0, 0)),  # kron weight
                    pl.BlockSpec((bc, in_elems), lambda i: (i, 0)),          # x1 block
                    pl.BlockSpec((bc, out_elems), lambda i: (i, 0)),         # x2 block
                ],
                out_specs=pl.BlockSpec((bc, out_elems), lambda i: (i, 0)),
            ),
            compiler_params=compiler_params,
            **kwargs,
        )(wt, x1_flat, x2_flat)
        return out_flat.reshape(N, C, Hout, Wout)

    # Separable fallback: two small matmuls per channel, no big resident weight.
    wy_j = jnp.asarray(wy)       # (Hout, Hin)
    wxt_j = jnp.asarray(wx.T)    # (Win, Wout)
    x1_r = x1.reshape(nc, Hin, Win)
    x2_r = x2.reshape(nc, Hout, Wout)

    per_row = (_padded_bytes(Hin, Win) + 2 * _padded_bytes(Hout, Wout)) * 2
    resident = 2 * (_padded_bytes(Hout, Hin) + _padded_bytes(Win, Wout))
    bc = _choose_block_channels(nc, per_row, resident, vmem_limit, two_cores)
    grid = (pl.cdiv(nc, bc),)

    kwargs = {"input_output_aliases": {3: 0}} if donate_x2 else {}
    out_r = pl.pallas_call(
        _separable_interp_add_kernel,
        out_shape=jax.ShapeDtypeStruct((nc, Hout, Wout), x2.dtype),
        grid_spec=pltpu.PrefetchScalarGridSpec(
            num_scalar_prefetch=0,
            grid=grid,
            in_specs=[
                pl.BlockSpec((Hout, Hin), lambda i: (0, 0)),        # Wy
                pl.BlockSpec((Win, Wout), lambda i: (0, 0)),        # Wx^T
                pl.BlockSpec((bc, Hin, Win), lambda i: (i, 0, 0)),  # x1 block
                pl.BlockSpec((bc, Hout, Wout), lambda i: (i, 0, 0)),
            ],
            out_specs=pl.BlockSpec((bc, Hout, Wout), lambda i: (i, 0, 0)),
        ),
        compiler_params=compiler_params,
        **kwargs,
    )(wy_j, wxt_j, x1_r, x2_r)
    return out_r.reshape(N, C, Hout, Wout)
    # TODO(synk): bf16 weight/activation option (f32 MXU is emulated) for the
    # compute-bound large-spatial regime, gated on an accuracy flag.


if __name__ == "__main__":
    key = jax.random.PRNGKey(0)
    k1, k2 = jax.random.split(key)

    # Small shapes consistent with the module: x1 is bicubic-upsampled to x2's
    # spatial dims, channel counts kept equal so the residual add is well-defined.
    N, C, Hin, Win, Hout, Wout = 2, 64, 8, 8, 16, 16
    x1 = jax.random.normal(k1, (N, C, Hin, Win), dtype=jnp.float32)
    x2 = jax.random.normal(k2, (N, C, Hout, Wout), dtype=jnp.float32)

    run = jax.jit(bicubic_upsample_add, static_argnames=("donate_x2", "force_path"))

    out = run(x1, x2)  # auto -> kron path at these sizes
    jax.block_until_ready(out)

    # Pure-JAX reference (separable formulation).
    wy_ref = jnp.asarray(bicubic_weight_matrix(Hin, Hout))
    wx_ref = jnp.asarray(bicubic_weight_matrix(Win, Wout))
    ref = jnp.einsum("oh,nchw,pw->ncop", wy_ref, x1, wx_ref) + x2
    np.testing.assert_allclose(np.asarray(out), np.asarray(ref), rtol=1e-4, atol=1e-4)

    # Also exercise the separable fallback path (used for large spatial sizes).
    out_sep = run(x1, x2, force_path="separable")
    jax.block_until_ready(out_sep)
    np.testing.assert_allclose(np.asarray(out_sep), np.asarray(ref), rtol=1e-4, atol=1e-4)

    print("KERNEL_OK")
</pallas_src>

<mosaic_0001>
module attributes {stable_mosaic.version = 11 : i64} {
  func.func @_kron_interp_add_kernel(%arg0: i32, %arg1: memref<64x256xf32, #tpu.memory_space<vmem>>, %arg2: memref<64x64xf32, #tpu.memory_space<vmem>>, %arg3: memref<64x256xf32, #tpu.memory_space<vmem>>, %arg4: memref<64x256xf32, #tpu.memory_space<vmem>>) attributes {dimension_semantics = [#tpu.dimension_semantics<parallel>], iteration_bounds = array<i64: 2>, scalar_prefetch = 0 : i64, scratch_operands = 0 : i64, tpu.core_type = #tpu.core_type<tc>, window_params = [{pipeline_mode = #tpu.pipeline_mode<synchronous>, transform_indices = @transform_0, window_bounds = array<i64: 64, 256>}, {transform_indices = @transform_1, window_bounds = array<i64: 64, 64>}, {transform_indices = @transform_2, window_bounds = array<i64: 64, 256>}, {transform_indices = @transform_3, window_bounds = array<i64: 64, 256>}]} {
    %c0 = arith.constant 0 : index
    %c0_0 = arith.constant 0 : index
    %0 = vector.load %arg2[%c0, %c0_0] : memref<64x64xf32, #tpu.memory_space<vmem>>, vector<64x64xf32>
    %c0_1 = arith.constant 0 : index
    %c0_2 = arith.constant 0 : index
    %1 = vector.load %arg1[%c0_1, %c0_2] : memref<64x256xf32, #tpu.memory_space<vmem>>, vector<64x256xf32>
    %cst = arith.constant dense<0.000000e+00> : vector<64x256xf32>
    %2 = tpu.matmul %0, %1, %cst {dimension_numbers = #tpu.dot_dimension_numbers<[1], [0], [0], [1], [0, 0, 1, 1], [], []>} : vector<64x64xf32>, vector<64x256xf32>, vector<64x256xf32> -> vector<64x256xf32>
    %c0_3 = arith.constant 0 : index
    %c0_4 = arith.constant 0 : index
    %3 = vector.load %arg3[%c0_3, %c0_4] : memref<64x256xf32, #tpu.memory_space<vmem>>, vector<64x256xf32>
    %4 = arith.addf %2, %3 : vector<64x256xf32>
    %c0_5 = arith.constant 0 : index
    %c0_6 = arith.constant 0 : index
    %5 = vector.load %arg4[%c0_5, %c0_6] : memref<64x256xf32, #tpu.memory_space<vmem>>, vector<64x256xf32>
    tpu.vector_store %arg4[%c0_5, %c0_6], %4 {strides = array<i32>} : memref<64x256xf32, #tpu.memory_space<vmem>>, vector<64x256xf32>,
    return
  }
  func.func @transform_0(%arg0: i32) -> (i32, i32) {
    %c0_i32 = arith.constant 0 : i32
    %c0_i32_0 = arith.constant 0 : i32
    %c0_i32_1 = arith.constant 0 : i32
    return %c0_i32, %c0_i32_0 : i32, i32
  }
  func.func @transform_1(%arg0: i32) -> (i32, i32) {
    %c0_i32 = arith.constant 0 : i32
    %c0_i32_0 = arith.constant 0 : i32
    return %arg0, %c0_i32 : i32, i32
  }
  func.func @transform_2(%arg0: i32) -> (i32, i32) {
    %c0_i32 = arith.constant 0 : i32
    %c0_i32_0 = arith.constant 0 : i32
    return %arg0, %c0_i32 : i32, i32
  }
  func.func @transform_3(%arg0: i32) -> (i32, i32) {
    %c0_i32 = arith.constant 0 : i32
    %c0_i32_0 = arith.constant 0 : i32
    return %arg0, %c0_i32 : i32, i32
  }
}

</mosaic_0001>

<llo_original>
// kernel: bicubic_upsample_add.1
$region0: #{bicubic_upsample_add.1}
  #allocation0 [shape = 'u32[]', space=smem, size = 0x4, offset = 0x4, fixed_abs, tag = 'smem constant byte address 0x4 - core index']
  #allocation1 [shape = 'u32[72,128]{1,0:T(1,128)}', space=vmem, size = 0x9000, scoped, tag = 'internal scratch']
  %s0 = inlined_call_operand.vmem [shape: f32[64,256], index: 0, kind: input, shape index: {}]
  %s1 = inlined_call_operand.vmem [shape: f32[128,64], index: 1, kind: input, shape index: {}]
  %s2 = inlined_call_operand.vmem [shape: f32[128,256], index: 2, kind: input, shape index: {}]
  %s3 = inlined_call_operand.vmem [shape: f32[128,256], index: 3, kind: output, shape index: {}]
  %s4 = sld [smem:[#allocation0]]
  $region45: #{bicubic_upsample_add.1} parent=0
    _
  %s6 = ssub.s32 1, %s4
  %s7 = scalar_select 0, %s6, %s4
  loop: start=0, step=1, limit=4
  $region2: #{bicubic_upsample_add.1} parent=0 // loop_pre_header
    _
  $region3: #{bicubic_upsample_add.1} parent=0 // loop_header
    %s9 = sphi 0, %s13
    %p10 = scmp.ge.s32.totalorder %s9, 4
    %s17 = sphi 0, %s17
    %s19 = sphi 0, %s17
    %s20 = sphi 0, %s19
    %s34 = sphi 0, %s20
    %s40 = sphi 0, %s42
    %s43 = sphi 0, %s40
    %s44 = sphi 0, %s43
    %s60 = sphi 0, %s44
    %s66 = sphi 0, %s68
    %s69 = sphi 0, %s66
    %s70 = sphi 0, %s69
    %s86 = sphi 0, %s70
    %s92 = sphi 0, %s94
    %s95 = sphi 0, %s92
    %s96 = sphi 0, %s95
    %s112 = sphi 0, %s96
  $region4: #{bicubic_upsample_add.1} parent=0 // loop_header_branch
    %12 = sbr.rel (%p10) target = $region8
  $region5: #{bicubic_upsample_add.1} parent=0 // loop_body
    %s14 = ssub.s32 %s9, 1
    %s15 = ssub.s32 %s9, 2
    %s16 = sadd.s32 %s9, 1
    %s18 = sadd.s32 %s17, 1
    %p21 = scmp.eq.s32.totalorder %s9, 1
    %p22 = scmp.ne.s32.totalorder %s17, %s19
    %p23 = scmp.eq.s32.totalorder %s9, 0
    %p24 = por %p22, %p23
    %p25 = scmp.ne.s32.totalorder %s17, %s19
    %p26 = scmp.eq.s32.totalorder %s14, 1
    %p27 = por %p25, %p26
    %p28 = scmp.ne.s32.totalorder %s19, %s20
    %p29 = scmp.eq.s32.totalorder %s14, 0
    %p30 = por %p28, %p29
    %p31 = scmp.ne.s32.totalorder %s19, %s20
    %p32 = scmp.eq.s32.totalorder %s15, 1
    %p33 = por %p31, %p32
    %p35 = scmp.ne.s32.totalorder %s20, %s34
    %p36 = scmp.eq.s32.totalorder %s15, 0
    %p37 = por %p35, %p36
    %s38 = ssub.s32 %s9, %s16
    %p39 = scmp.eq.s32.totalorder %s38, 0
    %s41 = sadd.s32 %s40, 1
    %s42 = scalar_select %p39, %s40, %s41
    %p45 = pneg %p39
    %p46 = scmp.eq.s32.totalorder %s9, 1
    %p47 = por %p45, %p46
    %p48 = scmp.ne.s32.totalorder %s40, %s43
    %p49 = scmp.eq.s32.totalorder %s9, 0
    %p50 = por %p48, %p49
    %p51 = scmp.ne.s32.totalorder %s40, %s43
    %p52 = scmp.eq.s32.totalorder %s14, 1
    %p53 = por %p51, %p52
    %p54 = scmp.ne.s32.totalorder %s43, %s44
    %p55 = scmp.eq.s32.totalorder %s14, 0
    %p56 = por %p54, %p55
    %p57 = scmp.ne.s32.totalorder %s43, %s44
    %p58 = scmp.eq.s32.totalorder %s15, 1
    %p59 = por %p57, %p58
    %p61 = scmp.ne.s32.totalorder %s44, %s60
    %p62 = scmp.eq.s32.totalorder %s15, 0
    %p63 = por %p61, %p62
    %s64 = ssub.s32 %s9, %s16
    %p65 = scmp.eq.s32.totalorder %s64, 0
    %s67 = sadd.s32 %s66, 1
    %s68 = scalar_select %p65, %s66, %s67
    %p71 = pneg %p65
    %p72 = scmp.eq.s32.totalorder %s9, 1
    %p73 = por %p71, %p72
    %p74 = scmp.ne.s32.totalorder %s66, %s69
    %p75 = scmp.eq.s32.totalorder %s9, 0
    %p76 = por %p74, %p75
    %p77 = scmp.ne.s32.totalorder %s66, %s69
    %p78 = scmp.eq.s32.totalorder %s14, 1
    %p79 = por %p77, %p78
    %p80 = scmp.ne.s32.totalorder %s69, %s70
    %p81 = scmp.eq.s32.totalorder %s14, 0
    %p82 = por %p80, %p81
    %p83 = scmp.ne.s32.totalorder %s69, %s70
    %p84 = scmp.eq.s32.totalorder %s15, 1
    %p85 = por %p83, %p84
    %p87 = scmp.ne.s32.totalorder %s70, %s86
    %p88 = scmp.eq.s32.totalorder %s15, 0
    %p89 = por %p87, %p88
    %s90 = ssub.s32 %s9, %s16
    %p91 = scmp.eq.s32.totalorder %s90, 0
    %s93 = sadd.s32 %s92, 1
    %s94 = scalar_select %p91, %s92, %s93
    %p97 = pneg %p91
    %p98 = scmp.eq.s32.totalorder %s9, 1
    %p99 = por %p97, %p98
    %p100 = scmp.ne.s32.totalorder %s92, %s95
    %p101 = scmp.eq.s32.totalorder %s9, 0
    %p102 = por %p100, %p101
    %p103 = scmp.ne.s32.totalorder %s92, %s95
    %p104 = scmp.eq.s32.totalorder %s14, 1
    %p105 = por %p103, %p104
    %p106 = scmp.ne.s32.totalorder %s95, %s96
    %p107 = scmp.eq.s32.totalorder %s14, 0
    %p108 = por %p106, %p107
    %p109 = scmp.ne.s32.totalorder %s95, %s96
    %p110 = scmp.eq.s32.totalorder %s15, 1
    %p111 = por %p109, %p110
    %p113 = scmp.ne.s32.totalorder %s96, %s112
    %p114 = scmp.eq.s32.totalorder %s15, 0
    %p115 = por %p113, %p114
    %p116 = scmp.le.s32.totalorder 1, %s9
    %p117 = scmp.lt.s32.totalorder %s9, 3
    %p118 = pnand %p116, %p117
    %p119 = pneg %p118
    // Predicated region
    $region9: #{bicubic_upsample_add.1} parent=5 // pred_check
      _
    $region10: #{bicubic_upsample_add.1} parent=5 // pred_check_branch
      %121 = sbr.rel (%p118) target = $region12
    $region11: #{bicubic_upsample_add.1} parent=5 // pred_region
      %s122 = ssub.s32 %s9, 1
      // Predicated region
      $region13: #{bicubic_upsample_add.1} parent=11 // pred_check
        %p123 = pneg %p30
      $region14: #{bicubic_upsample_add.1} parent=11 // pred_check_branch
        %125 = sbr.rel (%p123) target = $region16
      $region15: #{bicubic_upsample_add.1} parent=11 // pred_region
        _
      $region16: #{bicubic_upsample_add.1} parent=11 // pred_fallthru
        _
    $region12: #{bicubic_upsample_add.1} parent=5 // pred_fallthru
      _
    %p126 = scmp.lt.s32.totalorder %s9, 2
    // Predicated region
    $region17: #{bicubic_upsample_add.1} parent=5 // pred_check
      %p127 = pneg %p126
    $region18: #{bicubic_upsample_add.1} parent=5 // pred_check_branch
      %129 = sbr.rel (%p127) target = $region20
    $region19: #{bicubic_upsample_add.1} parent=5 // pred_region
      // Predicated region
      $region21: #{bicubic_upsample_add.1} parent=19 // pred_check
        %p130 = pneg %p50
      $region22: #{bicubic_upsample_add.1} parent=19 // pred_check_branch
        %132 = sbr.rel (%p130) target = $region24
      $region23: #{bicubic_upsample_add.1} parent=19 // pred_region
        %s133 = smul.u32 8, %s9
        %p134 = scmp.lt.s32.totalorder %s133, 15
        %s135 = scalar_select %p134, %s133, 15
        %s136 = smul.addr %s135, 8
        %s137 = scalar_lea.vmem %s1, %s136
        %s138 = smul.u32 8, %s9
      $region24: #{bicubic_upsample_add.1} parent=19 // pred_fallthru
        _
      // Predicated region
      $region25: #{bicubic_upsample_add.1} parent=19 // pred_check
        %p139 = pneg %p76
      $region26: #{bicubic_upsample_add.1} parent=19 // pred_check_branch
        %141 = sbr.rel (%p139) target = $region28
      $region27: #{bicubic_upsample_add.1} parent=19 // pred_region
        %s142 = smul.u32 8, %s9
        %p143 = scmp.lt.s32.totalorder %s142, 15
        %s144 = scalar_select %p143, %s142, 15
        %s145 = smul.addr %s144, 2
        %s146 = smul.addr %s145, 8
        %s147 = scalar_lea.vmem %s2, %s146
        %s148 = smul.u32 8, %s9
      $region28: #{bicubic_upsample_add.1} parent=19 // pred_fallthru
        _
    $region20: #{bicubic_upsample_add.1} parent=5 // pred_fallthru
      _
    %p149 = scmp.le.s32.totalorder 1, %s9
    %p150 = scmp.lt.s32.totalorder %s9, 3
    %p151 = pnand %p149, %p150
    %p152 = pneg %p151
    // Predicated region
    $region29: #{bicubic_upsample_add.1} parent=5 // pred_check
      _
    $region30: #{bicubic_upsample_add.1} parent=5 // pred_check_branch
      %154 = sbr.rel (%p151) target = $region32
    $region31: #{bicubic_upsample_add.1} parent=5 // pred_region
      %s155 = ssub.s32 %s9, 1
      %p156 = pneg %p30
      %p157 = pneg %p27
      %s158 = smul.u32 8, %s14
      %p159 = scmp.lt.s32.totalorder %s158, 15
      %s160 = scalar_select %p159, %s158, 15
      %s161 = smul.addr %s160, 8
      %s162 = scalar_lea.vmem %s1, %s161
      %p163 = pneg %p56
      %p164 = pneg %p53
      %s165 = smul.u32 8, %s14
      %p166 = scmp.lt.s32.totalorder %s165, 15
      %s167 = scalar_select %p166, %s165, 15
      %s168 = smul.addr %s167, 2
      %s169 = smul.addr %s168, 8
      %s170 = scalar_lea.vmem %s2, %s169
      %p171 = pneg %p82
      %p172 = pneg %p79
      %p173 = pneg %p108
      %p174 = pneg %p105
      %s175 = smul.u32 8, %s14
      %p176 = scmp.lt.s32.totalorder %s175, 15
      %s177 = scalar_select %p176, %s175, 15
      %s178 = smul.addr %s177, 2
      %s179 = smul.addr %s178, 8
      %s180 = scalar_lea.vmem %s3, %s179
      %s181 = smul.u32 8, %s14
      %p182 = scmp.lt.s32.totalorder %s181, 15
      %s183 = scalar_select %p182, %s181, 15
      %s184 = smul.addr %s183, 8
      %s185 = scalar_lea.vmem %s1, %s184
      %s186 = smul.u32 8, %s14
      %s187 = smul.u32 8, %s14
      %p188 = scmp.lt.s32.totalorder %s187, 15
      %s189 = scalar_select %p188, %s187, 15
      %s190 = smul.addr %s189, 2
      %s191 = smul.addr %s190, 8
      %s192 = scalar_lea.vmem %s2, %s191
      %s193 = smul.u32 8, %s14
      %s194 = smul.u32 8, %s14
      %p195 = scmp.lt.s32.totalorder %s194, 15
      %s196 = scalar_select %p195, %s194, 15
      %s197 = smul.addr %s196, 2
      %s198 = smul.addr %s197, 8
      %s199 = scalar_lea.vmem %s3, %s198
      %s200 = smul.u32 8, %s14
      %v201 = vld [vmem:[%s185] sm:$0xff]
      %v202 = vld [vmem:[%s185 + $0x8] sm:$0xff]
      %v203 = vld [vmem:[%s185 + $0x10] sm:$0xff]
      %v204 = vld [vmem:[%s185 + $0x18] sm:$0xff]
      %v205 = vld [vmem:[%s185 + $0x20] sm:$0xff]
      %v206 = vld [vmem:[%s185 + $0x28] sm:$0xff]
      %v207 = vld [vmem:[%s185 + $0x30] sm:$0xff]
      %v208 = vld [vmem:[%s185 + $0x38] sm:$0xff]
      %v209 = vld [vmem:[%s0] sm:$0xff]
      %v210 = vld [vmem:[%s0 + $0x8] sm:$0xff]
      %v211 = vld [vmem:[%s0 + $0x10] sm:$0xff]
      %v212 = vld [vmem:[%s0 + $0x18] sm:$0xff]
      %v213 = vld [vmem:[%s0 + $0x20] sm:$0xff]
      %v214 = vld [vmem:[%s0 + $0x28] sm:$0xff]
      %v215 = vld [vmem:[%s0 + $0x30] sm:$0xff]
      %v216 = vld [vmem:[%s0 + $0x38] sm:$0xff]
      %v217 = vld [vmem:[%s0 + $0x40] sm:$0xff]
      %v218 = vld [vmem:[%s0 + $0x48] sm:$0xff]
      %v219 = vld [vmem:[%s0 + $0x50] sm:$0xff]
      %v220 = vld [vmem:[%s0 + $0x58] sm:$0xff]
      %v221 = vld [vmem:[%s0 + $0x60] sm:$0xff]
      %v222 = vld [vmem:[%s0 + $0x68] sm:$0xff]
      %v223 = vld [vmem:[%s0 + $0x70] sm:$0xff]
      %v224 = vld [vmem:[%s0 + $0x78] sm:$0xff]
      %v225 = vld [vmem:[%s192] sm:$0xff]
      %v226 = vld [vmem:[%s192 + $0x8] sm:$0xff]
      %v227 = vld [vmem:[%s192 + $0x10] sm:$0xff]
      %v228 = vld [vmem:[%s192 + $0x18] sm:$0xff]
      %v229 = vld [vmem:[%s192 + $0x20] sm:$0xff]
      %v230 = vld [vmem:[%s192 + $0x28] sm:$0xff]
      %v231 = vld [vmem:[%s192 + $0x30] sm:$0xff]
      %v232 = vld [vmem:[%s192 + $0x38] sm:$0xff]
      %v233 = vld [vmem:[%s192 + $0x40] sm:$0xff]
      %v234 = vld [vmem:[%s192 + $0x48] sm:$0xff]
      %v235 = vld [vmem:[%s192 + $0x50] sm:$0xff]
      %v236 = vld [vmem:[%s192 + $0x58] sm:$0xff]
      %v237 = vld [vmem:[%s192 + $0x60] sm:$0xff]
      %v238 = vld [vmem:[%s192 + $0x68] sm:$0xff]
      %v239 = vld [vmem:[%s192 + $0x70] sm:$0xff]
      %v240 = vld [vmem:[%s192 + $0x78] sm:$0xff]
      %vm241 = vcmask 523264
      %v243 = vsel %vm241, %v201, 0
      %v246 = vsel %vm241, %v202, 0
      %v249 = vsel %vm241, %v203, 0
      %v252 = vsel %vm241, %v204, 0
      %v255 = vsel %vm241, %v205, 0
      %v258 = vsel %vm241, %v206, 0
      %v261 = vsel %vm241, %v207, 0
      %v264 = vsel %vm241, %v208, 0
      %266 = vmatpush.msra.mxu0 0.0
      %267 = vmatpush.msra.mxu0 0.0
      %268 = vmatpush.msra.mxu0 0.0
      %269 = vmatpush.msra.mxu0 0.0
      %270 = vmatpush.msra.mxu0 0.0
      %271 = vmatpush.msra.mxu0 0.0
      %272 = vmatpush.msra.mxu0 0.0
      %273 = vmatpush.msra.mxu0 0.0
      %274 = vmatpush.msra.mxu0 %v223
      %275 = vmatpush.msra.mxu0 %v221
      %276 = vmatpush.msra.mxu0 %v219
      %277 = vmatpush.msra.mxu0 %v217
      %278 = vmatpush.msra.mxu0 %v215
      %279 = vmatpush.msra.mxu0 %v213
      %280 = vmatpush.msra.mxu0 %v211
      %281 = vmatpush.msra.mxu0 %v209
      %282 = vmatmul.f32.gmra.mxu0 %v243
      %v283 = vpop.f32.mrf.mxu0
      %v284 = vadd.f32 %v225, %v283
      %285 = vmatmul.f32.gmra.mxu0 %v246
      %v286 = vpop.f32.mrf.mxu0
      %v287 = vadd.f32 %v227, %v286
      %288 = vmatmul.f32.gmra.mxu0 %v249
      %v289 = vpop.f32.mrf.mxu0
      %v290 = vadd.f32 %v229, %v289
      %291 = vmatmul.f32.gmra.mxu0 %v252
      %v292 = vpop.f32.mrf.mxu0
      %v293 = vadd.f32 %v231, %v292
      %294 = vmatmul.f32.gmra.mxu0 %v255
      %v295 = vpop.f32.mrf.mxu0
      %v296 = vadd.f32 %v233, %v295
      %297 = vmatmul.f32.gmra.mxu0 %v258
      %v298 = vpop.f32.mrf.mxu0
      %v299 = vadd.f32 %v235, %v298
      %300 = vmatmul.f32.gmra.mxu0 %v261
      %v301 = vpop.f32.mrf.mxu0
      %v302 = vadd.f32 %v237, %v301
      %303 = vmatmul.f32.gmra.mxu0 %v264
      %v304 = vpop.f32.mrf.mxu0
      %v305 = vadd.f32 %v239, %v304
      %306 = vdwg.mxu0
      %307 = vmatpush.msra.mxu0 0.0
      %308 = vmatpush.msra.mxu0 0.0
      %309 = vmatpush.msra.mxu0 0.0
      %310 = vmatpush.msra.mxu0 0.0
      %311 = vmatpush.msra.mxu0 0.0
      %312 = vmatpush.msra.mxu0 0.0
      %313 = vmatpush.msra.mxu0 0.0
      %314 = vmatpush.msra.mxu0 0.0
      %315 = vmatpush.msra.mxu0 %v224
      %316 = vmatpush.msra.mxu0 %v222
      %317 = vmatpush.msra.mxu0 %v220
      %318 = vmatpush.msra.mxu0 %v218
      %319 = vmatpush.msra.mxu0 %v216
      %320 = vmatpush.msra.mxu0 %v214
      %321 = vmatpush.msra.mxu0 %v212
      %322 = vmatpush.msra.mxu0 %v210
      %323 = vmatmul.f32.gmra.mxu0 %v243
      %v324 = vpop.f32.mrf.mxu0
      %v325 = vadd.f32 %v226, %v324
      %326 = vmatmul.f32.gmra.mxu0 %v246
      %v327 = vpop.f32.mrf.mxu0
      %v328 = vadd.f32 %v228, %v327
      %329 = vmatmul.f32.gmra.mxu0 %v249
      %v330 = vpop.f32.mrf.mxu0
      %v331 = vadd.f32 %v230, %v330
      %332 = vmatmul.f32.gmra.mxu0 %v252
      %v333 = vpop.f32.mrf.mxu0
      %v334 = vadd.f32 %v232, %v333
      %335 = vmatmul.f32.gmra.mxu0 %v255
      %v336 = vpop.f32.mrf.mxu0
      %v337 = vadd.f32 %v234, %v336
      %338 = vmatmul.f32.gmra.mxu0 %v258
      %v339 = vpop.f32.mrf.mxu0
      %v340 = vadd.f32 %v236, %v339
      %341 = vmatmul.f32.gmra.mxu0 %v261
      %v342 = vpop.f32.mrf.mxu0
      %v343 = vadd.f32 %v238, %v342
      %344 = vmatmul.f32.gmra.mxu0 %v264
      %v345 = vpop.f32.mrf.mxu0
      %v346 = vadd.f32 %v240, %v345
      %347 = vdwg.mxu0
      %348 = vst [vmem:[%s199] sm:$0xff] %v284
      %349 = vst [vmem:[%s199 + $0x8] sm:$0xff] %v325
      %350 = vst [vmem:[%s199 + $0x10] sm:$0xff] %v287
      %351 = vst [vmem:[%s199 + $0x18] sm:$0xff] %v328
      %352 = vst [vmem:[%s199 + $0x20] sm:$0xff] %v290
      %353 = vst [vmem:[%s199 + $0x28] sm:$0xff] %v331
      %354 = vst [vmem:[%s199 + $0x30] sm:$0xff] %v293
      %355 = vst [vmem:[%s199 + $0x38] sm:$0xff] %v334
      %356 = vst [vmem:[%s199 + $0x40] sm:$0xff] %v296
      %357 = vst [vmem:[%s199 + $0x48] sm:$0xff] %v337
      %358 = vst [vmem:[%s199 + $0x50] sm:$0xff] %v299
      %359 = vst [vmem:[%s199 + $0x58] sm:$0xff] %v340
      %360 = vst [vmem:[%s199 + $0x60] sm:$0xff] %v302
      %361 = vst [vmem:[%s199 + $0x68] sm:$0xff] %v343
      %362 = vst [vmem:[%s199 + $0x70] sm:$0xff] %v305
      %363 = vst [vmem:[%s199 + $0x78] sm:$0xff] %v346
      %s364 = smul.u32 8, %s14
      %p365 = scmp.lt.s32.totalorder %s364, 15
      %s366 = scalar_select %p365, %s364, 15
      %s367 = smul.addr %s366, 2
      %s368 = smul.addr %s367, 8
      %s369 = scalar_lea.vmem %s3, %s368
      // Predicated region
      $region33: #{bicubic_upsample_add.1} parent=31 // pred_check
        %p370 = pneg %p105
      $region34: #{bicubic_upsample_add.1} parent=31 // pred_check_branch
        %372 = sbr.rel (%p370) target = $region36
      $region35: #{bicubic_upsample_add.1} parent=31 // pred_region
        %s373 = smul.u32 8, %s14
      $region36: #{bicubic_upsample_add.1} parent=31 // pred_fallthru
        _
    $region32: #{bicubic_upsample_add.1} parent=5 // pred_fallthru
      _
    %p374 = scmp.le.s32.totalorder 2, %s9
    // Predicated region
    $region37: #{bicubic_upsample_add.1} parent=5 // pred_check
      %p375 = pneg %p374
    $region38: #{bicubic_upsample_add.1} parent=5 // pred_check_branch
      %377 = sbr.rel (%p375) target = $region40
    $region39: #{bicubic_upsample_add.1} parent=5 // pred_region
      %s378 = ssub.s32 %s9, 2
      // Predicated region
      $region41: #{bicubic_upsample_add.1} parent=39 // pred_check
        %p379 = pneg %p111
      $region42: #{bicubic_upsample_add.1} parent=39 // pred_check_branch
        %381 = sbr.rel (%p379) target = $region44
      $region43: #{bicubic_upsample_add.1} parent=39 // pred_region
        %s382 = smul.u32 8, %s15
        %p383 = scmp.lt.s32.totalorder %s382, 15
        %s384 = scalar_select %p383, %s382, 15
        %s385 = smul.addr %s384, 2
        %s386 = smul.addr %s385, 8
        %s387 = scalar_lea.vmem %s3, %s386
      $region44: #{bicubic_upsample_add.1} parent=39 // pred_fallthru
        _
    $region40: #{bicubic_upsample_add.1} parent=5 // pred_fallthru
      _
  $region6: #{bicubic_upsample_add.1} parent=0 // loop_footer
    %s13 = sadd.s32 1, %s9
  $region7: #{bicubic_upsample_add.1} parent=0 // loop_footer_branch
    %8 = sbr.rel target = $region3
  $region8: #{bicubic_upsample_add.1} parent=0 // loop_exit
    _

</llo_original>
